<compile_context>
chip_gen: v5e
topology: v5e:2x2
jax: 0.10.0
libtpu: 0.0.40
codegen_flags: <defaults>
</compile_context>

<pallas_src>
import functools
import math

import jax
import jax.numpy as jnp
from jax.experimental import pallas as pl
from jax.experimental.pallas import tpu as pltpu


# ---------------------------------------------------------------------------
# helpers
# ---------------------------------------------------------------------------

def _pick_tile(dim, target, align):
    """Largest divisor of `dim` that is <= target and a multiple of `align`;
    falls back to the full dimension (always a legal block size)."""
    for cand in range(min(target, dim), 0, -1):
        if dim % cand == 0 and cand % align == 0:
            return cand
    return dim


def _compiler_params(dim_sem, block_bytes):
    """Explicit scoped-VMEM limit sized from the actual (double-buffered)
    block buffers with headroom, capped under v7x's 64 MiB physical VMEM."""
    limit = int(min(max(2 * block_bytes + (4 << 20), 16 << 20), 60 << 20))
    return pltpu.CompilerParams(dimension_semantics=dim_sem,
                                vmem_limit_bytes=limit)


def _gelu_tanh(x):
    c = 0.7978845608028654  # sqrt(2/pi)
    return 0.5 * x * (1.0 + jnp.tanh(c * (x + 0.044715 * x * x * x)))


# ---------------------------------------------------------------------------
# tiled linear:  y = x @ W^T + b   (optional fused tanh-GELU)
# ---------------------------------------------------------------------------

def linear_kernel(x_ref, w_ref, b_ref, o_ref, acc_ref, *, activation):
    kk = pl.program_id(2)

    @pl.when(kk == 0)
    def _():
        acc_ref[...] = jnp.zeros_like(acc_ref)

    # bf16 MXU operands, f32 accumulation in VMEM scratch.
    acc_ref[...] += jnp.dot(x_ref[...].astype(jnp.bfloat16),
                            w_ref[...].astype(jnp.bfloat16),
                            preferred_element_type=jnp.float32)

    @pl.when(kk == pl.num_programs(2) - 1)
    def _():
        r = acc_ref[...] + b_ref[...].astype(jnp.float32)
        if activation == "gelu_tanh":
            r = _gelu_tanh(r)
        o_ref[...] = r.astype(o_ref.dtype)


def linear(x, w, b=None, activation=None, m_block=256, n_block=512, k_block=512):
    """PyTorch nn.Linear semantics: x @ w.T + b, w is (out, in)."""
    orig_shape = x.shape
    K = orig_shape[-1]
    M = math.prod(orig_shape[:-1])
    N = w.shape[0]

    x2 = x.reshape(M, K)
    wt = jnp.transpose(w)                                   # (K, N)
    bias = (b if b is not None else jnp.zeros((N,), x.dtype)).reshape(1, N)

    tm = _pick_tile(M, m_block, 8)
    tn = _pick_tile(N, n_block, 128)
    tk = _pick_tile(K, k_block, 128)
    grid = (M // tm, N // tn, K // tk)

    block_bytes = 4 * (2 * (tm * tk + tk * tn + tn) + 3 * tm * tn)
    kernel = functools.partial(linear_kernel, activation=activation)

    out = pl.pallas_call(
        kernel,
        out_shape=jax.ShapeDtypeStruct((M, N), x.dtype),
        grid_spec=pltpu.PrefetchScalarGridSpec(
            num_scalar_prefetch=0, grid=grid,
            in_specs=[
                pl.BlockSpec((tm, tk), lambda i, j, kk: (i, kk)),
                pl.BlockSpec((tk, tn), lambda i, j, kk: (kk, j)),
                pl.BlockSpec((1, tn), lambda i, j, kk: (0, j)),
            ],
            out_specs=pl.BlockSpec((tm, tn), lambda i, j, kk: (i, j)),
            scratch_shapes=[pltpu.VMEM((tm, tn), jnp.float32)],
        ),
        compiler_params=_compiler_params(("parallel", "parallel", "arbitrary"),
                                         block_bytes),
    )(x2, wt, bias)
    return out.reshape(*orig_shape[:-1], N)


# ---------------------------------------------------------------------------
# LayerNorm (no affine, eps=1e-6) + modulation: (1+scale)*LN(x) + shift
# ---------------------------------------------------------------------------

def ln_mod_kernel(x_ref, scale_ref, shift_ref, o_ref, *, eps):
    x = x_ref[0].astype(jnp.float32)                        # (TL, dim), f32 stats
    mu = jnp.mean(x, axis=-1, keepdims=True)
    xc = x - mu
    var = jnp.mean(xc * xc, axis=-1, keepdims=True)
    y = xc * jax.lax.rsqrt(var + eps)
    out = (1.0 + scale_ref[0].astype(jnp.float32)) * y + shift_ref[0].astype(jnp.float32)
    o_ref[0] = out.astype(o_ref.dtype)


def ln_modulate(x, scale, shift, l_block=256, eps=1e-6):
    B, L, dim = x.shape
    tl = _pick_tile(L, l_block, 8)
    grid = (B, L // tl)
    block_bytes = 4 * (2 * (tl * dim + 2 * dim) + 2 * tl * dim)
    kernel = functools.partial(ln_mod_kernel, eps=eps)
    return pl.pallas_call(
        kernel,
        out_shape=jax.ShapeDtypeStruct((B, L, dim), x.dtype),
        grid_spec=pltpu.PrefetchScalarGridSpec(
            num_scalar_prefetch=0, grid=grid,
            in_specs=[
                pl.BlockSpec((1, tl, dim), lambda b, l: (b, l, 0)),
                pl.BlockSpec((1, 1, dim), lambda b, l: (b, 0, 0)),
                pl.BlockSpec((1, 1, dim), lambda b, l: (b, 0, 0)),
            ],
            out_specs=pl.BlockSpec((1, tl, dim), lambda b, l: (b, l, 0)),
        ),
        compiler_params=_compiler_params(("parallel", "parallel"), block_bytes),
    )(x, scale, shift)


# ---------------------------------------------------------------------------
# per-head RMSNorm (eps=1e-6), scale may include a folded sm_scale
# ---------------------------------------------------------------------------

def rmsnorm_kernel(x_ref, s_ref, o_ref):
    x = x_ref[...].astype(jnp.float32)
    rrms = jax.lax.rsqrt(jnp.mean(x * x, axis=-1, keepdims=True) + 1e-6)
    o_ref[...] = (x * rrms * s_ref[...].astype(jnp.float32)).astype(o_ref.dtype)


def rmsnorm_heads(x, scale, row_block=512):
    """x: (B, H, L, D); RMSNorm over D with per-channel scale (D,)."""
    B, H, L, D = x.shape
    R = B * H * L
    x2 = x.reshape(R, D)
    tr = _pick_tile(R, row_block, 8)
    block_bytes = 4 * (2 * (tr * D + D) + 2 * tr * D)
    out = pl.pallas_call(
        rmsnorm_kernel,
        out_shape=jax.ShapeDtypeStruct((R, D), x.dtype),
        grid_spec=pltpu.PrefetchScalarGridSpec(
            num_scalar_prefetch=0, grid=(R // tr,),
            in_specs=[pl.BlockSpec((tr, D), lambda i: (i, 0)),
                      pl.BlockSpec((1, D), lambda i: (0, 0))],
            out_specs=pl.BlockSpec((tr, D), lambda i: (i, 0)),
        ),
        compiler_params=_compiler_params(("parallel",), block_bytes),
    )(x2, scale.reshape(1, D))
    return out.reshape(B, H, L, D)


# ---------------------------------------------------------------------------
# flash attention (online softmax), output already rearranged to B L (H D)
# ---------------------------------------------------------------------------

def flash_attn_kernel(q_ref, k_ref, v_ref, o_ref, m_sc, l_sc, acc_sc):
    kv = pl.program_id(3)

    @pl.when(kv == 0)
    def _():
        m_sc[...] = jnp.full_like(m_sc, -jnp.inf)
        l_sc[...] = jnp.zeros_like(l_sc)
        acc_sc[...] = jnp.zeros_like(acc_sc)

    q = q_ref[0, 0].astype(jnp.bfloat16)        # (TLq, D); sm_scale folded into q
    k = k_ref[0, 0].astype(jnp.bfloat16)        # (TLk, D)

    s = jax.lax.dot_general(q, k, (((1,), (1,)), ((), ())),
                            preferred_element_type=jnp.float32)   # (TLq, TLk), f32

    m_prev = m_sc[...]
    m_new = jnp.maximum(m_prev, jnp.max(s, axis=-1, keepdims=True))
    alpha = jnp.exp(m_prev - m_new)
    p = jnp.exp(s - m_new)                      # unnormalized; normalization deferred
    l_sc[...] = alpha * l_sc[...] + jnp.sum(p, axis=-1, keepdims=True)
    acc_sc[...] = alpha * acc_sc[...] + jnp.dot(
        p.astype(jnp.bfloat16), v_ref[0, 0].astype(jnp.bfloat16),
        preferred_element_type=jnp.float32)
    m_sc[...] = m_new

    @pl.when(kv == pl.num_programs(3) - 1)
    def _():
        o_ref[0] = (acc_sc[...] * pl.reciprocal(l_sc[...], approx=True)
                    ).astype(o_ref.dtype)


def flash_attention(q, k, v, q_block=256, kv_block=512):
    """q, k, v: (B, H, L, D), sm_scale already folded into q.
    Returns (B, L, H*D) — the 'B H L D -> B L (H D)' rearrange is free here."""
    B, H, L, D = q.shape
    blq = _pick_tile(L, q_block, 8)
    blk = _pick_tile(L, kv_block, 8)
    grid = (B, L // blq, H, L // blk)

    block_bytes = 4 * (2 * (blq * D + 2 * blk * D) + 2 * blq * D + blq * (D + 2))
    return pl.pallas_call(
        flash_attn_kernel,
        out_shape=jax.ShapeDtypeStruct((B, L, H * D), q.dtype),
        grid_spec=pltpu.PrefetchScalarGridSpec(
            num_scalar_prefetch=0, grid=grid,
            in_specs=[
                pl.BlockSpec((1, 1, blq, D), lambda b, qi, h, kv: (b, h, qi, 0)),
                pl.BlockSpec((1, 1, blk, D), lambda b, qi, h, kv: (b, h, kv, 0)),
                pl.BlockSpec((1, 1, blk, D), lambda b, qi, h, kv: (b, h, kv, 0)),
            ],
            out_specs=pl.BlockSpec((1, blq, D), lambda b, qi, h, kv: (b, qi, h)),
            scratch_shapes=[
                pltpu.VMEM((blq, 1), jnp.float32),    # running max
                pltpu.VMEM((blq, 1), jnp.float32),    # running denominator
                pltpu.VMEM((blq, D), jnp.float32),    # f32 output accumulator
            ],
        ),
        compiler_params=_compiler_params(
            ("parallel", "parallel", "parallel", "arbitrary"), block_bytes),
    )(q, k, v)


# ---------------------------------------------------------------------------
# DoubleStreamBlock forward
# ---------------------------------------------------------------------------

def double_stream_block(img, txt, vec, pe, params, num_heads,
                        attn_q_block=256, attn_kv_block=512):
    del pe  # attention() in the reference module ignores pe (passed as **kwargs)
    B, L_img, dim = img.shape
    L_txt = txt.shape[1]
    D = dim // num_heads
    sm_scale = 1.0 / math.sqrt(D)

    vec_act = jax.nn.silu(vec)   # tiny (B, dim) elementwise — host-side glue

    def stream_pre(x, prefix):
        mod = linear(vec_act, params[f"{prefix}_mod_w"], params[f"{prefix}_mod_b"])
        mod = mod[:, None, :]
        shift1, scale1, gate1, shift2, scale2, gate2 = jnp.split(mod, 6, axis=-1)

        xm = ln_modulate(x, scale1, shift1)
        qkv = linear(xm, params[f"{prefix}_qkv_w"], None)    # qkv_bias=False
        Bx, Lx, _ = x.shape
        qkv = qkv.reshape(Bx, Lx, 3, num_heads, D)           # 'B L (K H D)'
        q = jnp.transpose(qkv[:, :, 0], (0, 2, 1, 3))        # (B, H, L, D)
        k = jnp.transpose(qkv[:, :, 1], (0, 2, 1, 3))
        v = jnp.transpose(qkv[:, :, 2], (0, 2, 1, 3))
        # QKNorm; sm_scale folded into the q scale (saves an L^2 multiply).
        q = rmsnorm_heads(q, params[f"{prefix}_q_scale"] * sm_scale)
        k = rmsnorm_heads(k, params[f"{prefix}_k_scale"])
        return q, k, v, (shift2, scale2, gate1, gate2)

    img_q, img_k, img_v, img_mods = stream_pre(img, "img")
    txt_q, txt_k, txt_v, txt_mods = stream_pre(txt, "txt")

    q = jnp.concatenate([txt_q, img_q], axis=2)
    k = jnp.concatenate([txt_k, img_k], axis=2)
    v = jnp.concatenate([txt_v, img_v], axis=2)

    attn = flash_attention(q, k, v, q_block=attn_q_block, kv_block=attn_kv_block)
    txt_attn = attn[:, :L_txt]
    img_attn = attn[:, L_txt:]

    def stream_post(x, attn_x, mods, prefix):
        shift2, scale2, gate1, gate2 = mods
        x = x + gate1 * linear(attn_x, params[f"{prefix}_proj_w"],
                               params[f"{prefix}_proj_b"])
        h = ln_modulate(x, scale2, shift2)
        h = linear(h, params[f"{prefix}_mlp_w1"], params[f"{prefix}_mlp_b1"],
                   activation="gelu_tanh")
        h = linear(h, params[f"{prefix}_mlp_w2"], params[f"{prefix}_mlp_b2"])
        return x + gate2 * h

    img_out = stream_post(img, img_attn, img_mods, "img")
    txt_out = stream_post(txt, txt_attn, txt_mods, "txt")
    return img_out, txt_out


# ---------------------------------------------------------------------------
# pure-JAX reference mirroring the PyTorch module (f32 everywhere)
# ---------------------------------------------------------------------------

def reference_block(img, txt, vec, params, num_heads):
    dim = img.shape[-1]
    D = dim // num_heads
    L_txt = txt.shape[1]

    def modulation(prefix):
        out = jax.nn.silu(vec) @ params[f"{prefix}_mod_w"].T + params[f"{prefix}_mod_b"]
        out = out[:, None, :]
        return jnp.split(out, 6, axis=-1)   # shift1, scale1, gate1, shift2, scale2, gate2

    def layernorm(x):
        mu = jnp.mean(x, -1, keepdims=True)
        var = jnp.mean((x - mu) ** 2, -1, keepdims=True)
        return (x - mu) / jnp.sqrt(var + 1e-6)

    def rms(x, s):
        rrms = jax.lax.rsqrt(jnp.mean(x * x, -1, keepdims=True) + 1e-6)
        return x * rrms * s

    def qkv_heads(x, prefix):
        B, L, _ = x.shape
        qkv = x @ params[f"{prefix}_qkv_w"].T
        qkv = qkv.reshape(B, L, 3, num_heads, D)
        q = jnp.transpose(qkv[:, :, 0], (0, 2, 1, 3))
        k = jnp.transpose(qkv[:, :, 1], (0, 2, 1, 3))
        v = jnp.transpose(qkv[:, :, 2], (0, 2, 1, 3))
        return rms(q, params[f"{prefix}_q_scale"]), rms(k, params[f"{prefix}_k_scale"]), v

    i_s1, i_sc1, i_g1, i_s2, i_sc2, i_g2 = modulation("img")
    t_s1, t_sc1, t_g1, t_s2, t_sc2, t_g2 = modulation("txt")

    iq, ik, iv = qkv_heads((1 + i_sc1) * layernorm(img) + i_s1, "img")
    tq, tk, tv = qkv_heads((1 + t_sc1) * layernorm(txt) + t_s1, "txt")

    q = jnp.concatenate([tq, iq], axis=2)
    k = jnp.concatenate([tk, ik], axis=2)
    v = jnp.concatenate([tv, iv], axis=2)

    s = jnp.einsum("bhqd,bhkd->bhqk", q, k) / math.sqrt(D)
    p = jax.nn.softmax(s, axis=-1)
    o = jnp.einsum("bhqk,bhkd->bhqd", p, v)
    B, H, L, _ = o.shape
    attn = jnp.transpose(o, (0, 2, 1, 3)).reshape(B, L, H * D)
    txt_attn, img_attn = attn[:, :L_txt], attn[:, L_txt:]

    def mlp(x, prefix):
        h = x @ params[f"{prefix}_mlp_w1"].T + params[f"{prefix}_mlp_b1"]
        h = jax.nn.gelu(h, approximate=True)
        return h @ params[f"{prefix}_mlp_w2"].T + params[f"{prefix}_mlp_b2"]

    img_out = img + i_g1 * (img_attn @ params["img_proj_w"].T + params["img_proj_b"])
    img_out = img_out + i_g2 * mlp((1 + i_sc2) * layernorm(img_out) + i_s2, "img")
    txt_out = txt + t_g1 * (txt_attn @ params["txt_proj_w"].T + params["txt_proj_b"])
    txt_out = txt_out + t_g2 * mlp((1 + t_sc2) * layernorm(txt_out) + t_s2, "txt")
    return img_out, txt_out


# ---------------------------------------------------------------------------
# demo
# ---------------------------------------------------------------------------

if __name__ == "__main__":
    B = 2
    hidden = 256
    num_heads = 2
    D = hidden // num_heads
    mlp_hidden = int(hidden * 4.0)
    L_img, L_txt = 48, 16
    L = L_img + L_txt

    key = jax.random.PRNGKey(0)
    keys = jax.random.split(key, 24)
    kit = iter(keys)

    def randn(shape, scale=0.02):
        return jax.random.normal(next(kit), shape, dtype=jnp.float32) * scale

    img = jax.random.normal(next(kit), (B, L_img, hidden), dtype=jnp.float32)
    txt = jax.random.normal(next(kit), (B, L_txt, hidden), dtype=jnp.float32)
    vec = jax.random.normal(next(kit), (B, hidden), dtype=jnp.float32)
    pe = jax.random.normal(next(kit), (1, L, D), dtype=jnp.float32)  # unused (API parity)

    params = {}
    for prefix in ("img", "txt"):
        params[f"{prefix}_mod_w"] = randn((6 * hidden, hidden))
        params[f"{prefix}_mod_b"] = randn((6 * hidden,))
        params[f"{prefix}_qkv_w"] = randn((3 * hidden, hidden))
        params[f"{prefix}_q_scale"] = jnp.ones((D,), jnp.float32)   # RMSNorm init
        params[f"{prefix}_k_scale"] = jnp.ones((D,), jnp.float32)
        params[f"{prefix}_proj_w"] = randn((hidden, hidden))
        params[f"{prefix}_proj_b"] = randn((hidden,))
        params[f"{prefix}_mlp_w1"] = randn((mlp_hidden, hidden))
        params[f"{prefix}_mlp_b1"] = randn((mlp_hidden,))
        params[f"{prefix}_mlp_w2"] = randn((hidden, mlp_hidden))
        params[f"{prefix}_mlp_b2"] = randn((hidden,))

    # Small attention tiles so the online-softmax / kv-reduction path is exercised.
    img_out, txt_out = double_stream_block(img, txt, vec, pe, params, num_heads,
                                           attn_q_block=32, attn_kv_block=32)
    img_out, txt_out = jax.block_until_ready((img_out, txt_out))

    img_ref, txt_ref = reference_block(img, txt, vec, params, num_heads)

    assert img_out.shape == (B, L_img, hidden) and txt_out.shape == (B, L_txt, hidden)
    # Tolerance accounts for the deliberate bf16 MXU operands (f32 accumulation).
    assert jnp.allclose(img_out, img_ref, rtol=2e-2, atol=2e-2), "img mismatch"
    assert jnp.allclose(txt_out, txt_ref, rtol=2e-2, atol=2e-2), "txt mismatch"

    print("KERNEL_OK")
</pallas_src>

<mosaic_0001>
module attributes {stable_mosaic.version = 11 : i64} {
  func.func @linear_kernel(%arg0: i32, %arg1: i32, %arg2: i32, %arg3: memref<2x256xf32, #tpu.memory_space<vmem>>, %arg4: memref<256x512xf32, #tpu.memory_space<vmem>>, %arg5: memref<1x512xf32, #tpu.memory_space<vmem>>, %arg6: memref<2x512xf32, #tpu.memory_space<vmem>>, %arg7: memref<2x512xf32, #tpu.memory_space<vmem>>) attributes {dimension_semantics = [#tpu.dimension_semantics<parallel>, #tpu.dimension_semantics<parallel>, #tpu.dimension_semantics<arbitrary>], iteration_bounds = array<i64: 1, 3, 1>, scalar_prefetch = 0 : i64, scratch_operands = 1 : i64, tpu.core_type = #tpu.core_type<tc>, window_params = [{transform_indices = @transform_0, window_bounds = array<i64: 2, 256>}, {transform_indices = @transform_1, window_bounds = array<i64: 256, 512>}, {transform_indices = @transform_2, window_bounds = array<i64: 1, 512>}, {transform_indices = @transform_3, window_bounds = array<i64: 2, 512>}]} {
    %c0_i32 = arith.constant 0 : i32
    %0 = arith.cmpi eq, %arg2, %c0_i32 : i32
    %1 = arith.extui %0 : i1 to i32
    %c0_i32_0 = arith.constant 0 : i32
    %2 = arith.cmpi ne, %1, %c0_i32_0 : i32
    scf.if %2 {
      %cst_10 = arith.constant 0.000000e+00 : f32
      %14 = vector.broadcast %cst_10 : f32 to vector<2x512xf32>
      %c0_11 = arith.constant 0 : index
      %c0_12 = arith.constant 0 : index
      %15 = vector.load %arg7[%c0_11, %c0_12] : memref<2x512xf32, #tpu.memory_space<vmem>>, vector<2x512xf32>
      tpu.vector_store %arg7[%c0_11, %c0_12], %14 {strides = array<i32>} : memref<2x512xf32, #tpu.memory_space<vmem>>, vector<2x512xf32>,
    } else {
    }
    %c0 = arith.constant 0 : index
    %c0_1 = arith.constant 0 : index
    %3 = vector.load %arg7[%c0, %c0_1] : memref<2x512xf32, #tpu.memory_space<vmem>>, vector<2x512xf32>
    %c0_2 = arith.constant 0 : index
    %c0_3 = arith.constant 0 : index
    %4 = vector.load %arg3[%c0_2, %c0_3] : memref<2x256xf32, #tpu.memory_space<vmem>>, vector<2x256xf32>
    %5 = arith.truncf %4 : vector<2x256xf32> to vector<2x256xbf16>
    %c0_4 = arith.constant 0 : index
    %c0_5 = arith.constant 0 : index
    %6 = vector.load %arg4[%c0_4, %c0_5] : memref<256x512xf32, #tpu.memory_space<vmem>>, vector<256x512xf32>
    %7 = arith.truncf %6 : vector<256x512xf32> to vector<256x512xbf16>
    %cst = arith.constant dense<0.000000e+00> : vector<2x512xf32>
    %8 = tpu.matmul %5, %7, %cst {dimension_numbers = #tpu.dot_dimension_numbers<[1], [0], [0], [1], [0, 0, 1, 1], [], []>} : vector<2x256xbf16>, vector<256x512xbf16>, vector<2x512xf32> -> vector<2x512xf32>
    %9 = arith.addf %3, %8 : vector<2x512xf32>
    %c0_6 = arith.constant 0 : index
    %c0_7 = arith.constant 0 : index
    %10 = vector.load %arg7[%c0_6, %c0_7] : memref<2x512xf32, #tpu.memory_space<vmem>>, vector<2x512xf32>
    tpu.vector_store %arg7[%c0_6, %c0_7], %9 {strides = array<i32>} : memref<2x512xf32, #tpu.memory_space<vmem>>, vector<2x512xf32>,
    %c0_i32_8 = arith.constant 0 : i32
    %11 = arith.cmpi eq, %arg2, %c0_i32_8 : i32
    %12 = arith.extui %11 : i1 to i32
    %c0_i32_9 = arith.constant 0 : i32
    %13 = arith.cmpi ne, %12, %c0_i32_9 : i32
    scf.if %13 {
      %c0_10 = arith.constant 0 : index
      %c0_11 = arith.constant 0 : index
      %14 = vector.load %arg7[%c0_10, %c0_11] : memref<2x512xf32, #tpu.memory_space<vmem>>, vector<2x512xf32>
      %c0_12 = arith.constant 0 : index
      %c0_13 = arith.constant 0 : index
      %15 = vector.load %arg5[%c0_12, %c0_13] : memref<1x512xf32, #tpu.memory_space<vmem>>, vector<1x512xf32>
      %16 = vector.broadcast %15 : vector<1x512xf32> to vector<2x512xf32>
      %17 = arith.addf %14, %16 : vector<2x512xf32>
      %c0_14 = arith.constant 0 : index
      %c0_15 = arith.constant 0 : index
      %18 = vector.load %arg6[%c0_14, %c0_15] : memref<2x512xf32, #tpu.memory_space<vmem>>, vector<2x512xf32>
      tpu.vector_store %arg6[%c0_14, %c0_15], %17 {strides = array<i32>} : memref<2x512xf32, #tpu.memory_space<vmem>>, vector<2x512xf32>,
    } else {
    }
    return
  }
  func.func @transform_0(%arg0: i32, %arg1: i32, %arg2: i32) -> (i32, i32) {
    %c0_i32 = arith.constant 0 : i32
    return %arg0, %arg2 : i32, i32
  }
  func.func @transform_1(%arg0: i32, %arg1: i32, %arg2: i32) -> (i32, i32) {
    %c0_i32 = arith.constant 0 : i32
    return %arg2, %arg1 : i32, i32
  }
  func.func @transform_2(%arg0: i32, %arg1: i32, %arg2: i32) -> (i32, i32) {
    %c0_i32 = arith.constant 0 : i32
    %c0_i32_0 = arith.constant 0 : i32
    return %c0_i32, %arg1 : i32, i32
  }
  func.func @transform_3(%arg0: i32, %arg1: i32, %arg2: i32) -> (i32, i32) {
    %c0_i32 = arith.constant 0 : i32
    return %arg0, %arg1 : i32, i32
  }
}

</mosaic_0001>

<llo_original>
// kernel: tpu_custom_call.1
$region0: #{tpu_custom_call.1}
  #allocation0 [shape = 'u32[]', space=smem, size = 0x4, offset = 0x4, fixed_abs, tag = 'smem constant byte address 0x4 - core index']
  #allocation1 [shape = 'u32[72,128]{1,0:T(1,128)}', space=vmem, size = 0x9000, scoped, tag = 'internal scratch']
  #allocation2 [shape = 'f32[2,512]{1,0:T(2,128)}', space=vmem, size = 0x1000, scoped, tag = 'scratch operand']
  %s0 = inlined_call_operand.hbm [shape: f32[2,256], index: 0, kind: input, shape index: {}]
  %s1 = inlined_call_operand.hbm [shape: f32[256,1536], index: 1, kind: input, shape index: {}]
  %s2 = inlined_call_operand.hbm [shape: f32[1,1536], index: 2, kind: input, shape index: {}]
  %s3 = inlined_call_operand.hbm [shape: f32[2,1536], index: 3, kind: output, shape index: {}]
  %s4 = sld [smem:[#allocation0]]
  $region65: #{tpu_custom_call.1} parent=0
    _
  %s6 = ssub.s32 1, %s4
  %s7 = scalar_select 0, %s6, %s4
  $region1: #{tpu_custom_call.1} parent=0
    #allocation3 [shape = 'u8[2048]{0}', space=vmem, size = 0x800, scoped, tag = 'input window, operand 0, single buffered']
    #allocation4 [shape = 's32[2]{0}', space=sflag, size = 0x8, scoped, tag = 'scoped memory for tpu_custom_call.1']
    #allocation5 [shape = 's32[2]{0}', space=sflag, size = 0x8, scoped, tag = 'scoped memory for tpu_custom_call.1']
    #allocation6 [shape = 'u8[1048576]{0}', space=vmem, size = 0x100000, scoped, tag = 'input window, operand 1']
    #allocation7 [shape = 's32[2]{0}', space=sflag, size = 0x8, scoped, tag = 'scoped memory for tpu_custom_call.1']
    #allocation8 [shape = 'u8[4096]{0}', space=vmem, size = 0x1000, scoped, tag = 'input window, operand 2']
    #allocation9 [shape = 'u8[8192]{0}', space=vmem, size = 0x2000, scoped, tag = 'output window, operand 0']
    %8 = vsyncpa [#allocation4], 0
    %9 = vsyncpa [#allocation7], 0
    %s10 = scalar_lea.sflag [#allocation7], 1
    %11 = vsyncpa %s10, 0
    %12 = vsyncpa [#allocation5], 0
    %s13 = scalar_lea.sflag [#allocation5], 1
    %14 = vsyncpa %s13, 0
    loop: start=0, step=1, limit=5
    $region2: #{tpu_custom_call.1} parent=1 // loop_pre_header
      _
    $region3: #{tpu_custom_call.1} parent=1 // loop_header
      %s16 = sphi 0, %s20
      %p17 = scmp.ge.s32.totalorder %s16, 5
      %s23 = sphi 0, %s42
      %s24 = sphi 0, %s38
      %s25 = sphi 0, %s34
      %s26 = sphi 0, %s23
      %s27 = sphi 0, %s24
      %s28 = sphi 0, %s25
      %s29 = sphi 0, %s26
      %s30 = sphi 0, %s27
      %s31 = sphi 0, %s28
      %s47 = sphi 0, %s49
      %s50 = sphi 0, %s47
      %s51 = sphi 0, %s50
      %s67 = sphi 0, %s51
      %s75 = sphi 0, %s77
      %s78 = sphi 0, %s75
      %s79 = sphi 0, %s78
      %s95 = sphi 0, %s79
      %s101 = sphi 0, %s103
      %s104 = sphi 0, %s101
      %s105 = sphi 0, %s104
      %s121 = sphi 0, %s105
      %s129 = sphi 0, %s131
      %s132 = sphi 0, %s129
      %s133 = sphi 0, %s132
      %s149 = sphi 0, %s133
    $region4: #{tpu_custom_call.1} parent=1 // loop_header_branch
      %19 = sbr.rel (%p17) target = $region8
    $region5: #{tpu_custom_call.1} parent=1 // loop_body
      %s21 = ssub.s32 %s16, 1
      %s22 = ssub.s32 %s16, 2
      %s32 = sadd.s32 1, %s25
      %p33 = scmp.ge.s32.totalorder %s32, 1
      %s34 = scalar_select %p33, 0, %s32
      %s35 = sadd.s32 1, %s24
      %s36 = scalar_select %p33, %s35, %s24
      %p37 = scmp.ge.s32.totalorder %s36, 3
      %s38 = scalar_select %p37, 0, %s36
      %s39 = sadd.s32 1, %s23
      %s40 = scalar_select %p37, %s39, %s23
      %p41 = scmp.ge.s32.totalorder %s40, 1
      %s42 = scalar_select %p41, 0, %s40
      %s43 = ssub.s32 %s23, %s42
      %s44 = ssub.s32 %s25, %s34
      %s45 = sor.u32 %s43, %s44
      %p46 = scmp.eq.s32.totalorder %s45, 0
      %s48 = sadd.s32 %s47, 1
      %s49 = scalar_select %p46, %s47, %s48
      %p52 = pneg %p46
      %p53 = scmp.eq.s32.totalorder %s16, 2
      %p54 = por %p52, %p53
      %p55 = scmp.ne.s32.totalorder %s47, %s50
      %p56 = scmp.eq.s32.totalorder %s16, 0
      %p57 = por %p55, %p56
      %p58 = scmp.ne.s32.totalorder %s47, %s50
      %p59 = scmp.eq.s32.totalorder %s21, 2
      %p60 = por %p58, %p59
      %p61 = scmp.ne.s32.totalorder %s50, %s51
      %p62 = scmp.eq.s32.totalorder %s21, 0
      %p63 = por %p61, %p62
      %p64 = scmp.ne.s32.totalorder %s50, %s51
      %p65 = scmp.eq.s32.totalorder %s22, 2
      %p66 = por %p64, %p65
      %p68 = scmp.ne.s32.totalorder %s51, %s67
      %p69 = scmp.eq.s32.totalorder %s22, 0
      %p70 = por %p68, %p69
      %s71 = ssub.s32 %s25, %s34
      %s72 = ssub.s32 %s24, %s38
      %s73 = sor.u32 %s71, %s72
      %p74 = scmp.eq.s32.totalorder %s73, 0
      %s76 = sadd.s32 %s75, 1
      %s77 = scalar_select %p74, %s75, %s76
      %p80 = pneg %p74
      %p81 = scmp.eq.s32.totalorder %s16, 2
      %p82 = por %p80, %p81
      %p83 = scmp.ne.s32.totalorder %s75, %s78
      %p84 = scmp.eq.s32.totalorder %s16, 0
      %p85 = por %p83, %p84
      %p86 = scmp.ne.s32.totalorder %s75, %s78
      %p87 = scmp.eq.s32.totalorder %s21, 2
      %p88 = por %p86, %p87
      %p89 = scmp.ne.s32.totalorder %s78, %s79
      %p90 = scmp.eq.s32.totalorder %s21, 0
      %p91 = por %p89, %p90
      %p92 = scmp.ne.s32.totalorder %s78, %s79
      %p93 = scmp.eq.s32.totalorder %s22, 2
      %p94 = por %p92, %p93
      %p96 = scmp.ne.s32.totalorder %s79, %s95
      %p97 = scmp.eq.s32.totalorder %s22, 0
      %p98 = por %p96, %p97
      %s99 = ssub.s32 %s24, %s38
      %p100 = scmp.eq.s32.totalorder %s99, 0
      %s102 = sadd.s32 %s101, 1
      %s103 = scalar_select %p100, %s101, %s102
      %p106 = pneg %p100
      %p107 = scmp.eq.s32.totalorder %s16, 2
      %p108 = por %p106, %p107
      %p109 = scmp.ne.s32.totalorder %s101, %s104
      %p110 = scmp.eq.s32.totalorder %s16, 0
      %p111 = por %p109, %p110
      %p112 = scmp.ne.s32.totalorder %s101, %s104
      %p113 = scmp.eq.s32.totalorder %s21, 2
      %p114 = por %p112, %p113
      %p115 = scmp.ne.s32.totalorder %s104, %s105
      %p116 = scmp.eq.s32.totalorder %s21, 0
      %p117 = por %p115, %p116
      %p118 = scmp.ne.s32.totalorder %s104, %s105
      %p119 = scmp.eq.s32.totalorder %s22, 2
      %p120 = por %p118, %p119
      %p122 = scmp.ne.s32.totalorder %s105, %s121
      %p123 = scmp.eq.s32.totalorder %s22, 0
      %p124 = por %p122, %p123
      %s125 = ssub.s32 %s23, %s42
      %s126 = ssub.s32 %s24, %s38
      %s127 = sor.u32 %s125, %s126
      %p128 = scmp.eq.s32.totalorder %s127, 0
      %s130 = sadd.s32 %s129, 1
      %s131 = scalar_select %p128, %s129, %s130
      %p134 = pneg %p128
      %p135 = scmp.eq.s32.totalorder %s16, 2
      %p136 = por %p134, %p135
      %p137 = scmp.ne.s32.totalorder %s129, %s132
      %p138 = scmp.eq.s32.totalorder %s16, 0
      %p139 = por %p137, %p138
      %p140 = scmp.ne.s32.totalorder %s129, %s132
      %p141 = scmp.eq.s32.totalorder %s21, 2
      %p142 = por %p140, %p141
      %p143 = scmp.ne.s32.totalorder %s132, %s133
      %p144 = scmp.eq.s32.totalorder %s21, 0
      %p145 = por %p143, %p144
      %p146 = scmp.ne.s32.totalorder %s132, %s133
      %p147 = scmp.eq.s32.totalorder %s22, 2
      %p148 = por %p146, %p147
      %p150 = scmp.ne.s32.totalorder %s133, %s149
      %p151 = scmp.eq.s32.totalorder %s22, 0
      %p152 = por %p150, %p151
      %p153 = scmp.le.s32.totalorder 1, %s16
      %p154 = scmp.lt.s32.totalorder %s16, 4
      %p155 = pnand %p153, %p154
      %p156 = pneg %p155
      // Predicated region
      $region9: #{tpu_custom_call.1} parent=5 // pred_check
        _
      $region10: #{tpu_custom_call.1} parent=5 // pred_check_branch
        %158 = sbr.rel (%p155) target = $region12
      $region11: #{tpu_custom_call.1} parent=5 // pred_region
        %s159 = ssub.s32 %s16, 1
        // Predicated region
        $region13: #{tpu_custom_call.1} parent=11 // pred_check
          %p160 = pneg %p63
        $region14: #{tpu_custom_call.1} parent=11 // pred_check_branch
          %162 = sbr.rel (%p160) target = $region16
        $region15: #{tpu_custom_call.1} parent=11 // pred_region
          %s163 = smul.u32 2, %s28
          %165 = vsyncadd [#allocation4], 0
          %s166 = smul.addr %s26, 2
          %s167 = sadd.s32 %s163, %s166
          %s168 = smul.addr %s167, 2
          %s169 = scalar_lea.hbm %s0, %s168
          %s171 = sshll.u32 %s169, 4
          %s172 = int_to_ptr.hbm [resolvable:$true] %s171
          %s173 = sshll.u32 [#allocation3], 4
          %s174 = int_to_ptr.vmem [resolvable:$true] %s173
          %176 = dma.hbm_to_vmem [thread:$0]  %s172, 64, %s174, [#allocation4]
        $region16: #{tpu_custom_call.1} parent=11 // pred_fallthru
          _
      $region12: #{tpu_custom_call.1} parent=5 // pred_fallthru
        _
      %p177 = scmp.lt.s32.totalorder %s16, 3
      // Predicated region
      $region17: #{tpu_custom_call.1} parent=5 // pred_check
        %p178 = pneg %p177
      $region18: #{tpu_custom_call.1} parent=5 // pred_check_branch
        %180 = sbr.rel (%p178) target = $region20
      $region19: #{tpu_custom_call.1} parent=5 // pred_region
        // Predicated region
        $region21: #{tpu_custom_call.1} parent=19 // pred_check
          %p181 = pneg %p85
        $region22: #{tpu_custom_call.1} parent=19 // pred_check_branch
          %183 = sbr.rel (%p181) target = $region24
        $region23: #{tpu_custom_call.1} parent=19 // pred_region
          %s184 = sand.u32 %s16, 1
          %s185 = scalar_lea.sflag [#allocation7], %s184
          %s186 = sand.u32 %s75, 1
          %s187 = smul.addr %s186, 1024
          %s188 = scalar_lea.vmem [#allocation6], %s187
          %s189 = smul.u32 32, %s25
          %s190 = smul.u32 4, %s24
          %192 = vsyncadd %s185, 0
          %s193 = smul.addr %s189, 12
          %s194 = sadd.s32 %s190, %s193
          %s195 = smul.addr %s194, 8
          %s196 = scalar_lea.hbm %s1, %s195
          %s197 = sshll.u32 %s196, 4
          %s198 = int_to_ptr.hbm [resolvable:$true] %s197
          %s199 = sshll.u32 %s188, 4
          %s200 = int_to_ptr.vmem [resolvable:$true] %s199
          %205 = dma.hbm_to_vmem [thread:$0]  %s198, 16384, %s200, %s185, 1536, 512, 32
        $region24: #{tpu_custom_call.1} parent=19 // pred_fallthru
          _
        // Predicated region
        $region25: #{tpu_custom_call.1} parent=19 // pred_check
          %p206 = pneg %p111
        $region26: #{tpu_custom_call.1} parent=19 // pred_check_branch
          %208 = sbr.rel (%p206) target = $region28
        $region27: #{tpu_custom_call.1} parent=19 // pred_region
          %s209 = sand.u32 %s16, 1
          %s210 = scalar_lea.sflag [#allocation7], %s209
          %s211 = sand.u32 %s101, 1
          %s212 = smul.addr %s211, 4
          %s213 = scalar_lea.vmem [#allocation8], %s212
          %s214 = smul.u32 4, %s24
          %216 = vsyncadd %s210, 0
          %s217 = scalar_lea.hbm %s2, %s214
          %s219 = sshll.u32 %s217, 4
          %s220 = int_to_ptr.hbm [resolvable:$true] %s219
          %s221 = sshll.u32 %s213, 4
          %s222 = int_to_ptr.vmem [resolvable:$true] %s221
          %224 = dma.hbm_to_vmem [thread:$0]  %s220, 64, %s222, %s210
        $region28: #{tpu_custom_call.1} parent=19 // pred_fallthru
          _
      $region20: #{tpu_custom_call.1} parent=5 // pred_fallthru
        _
      %p225 = scmp.le.s32.totalorder 1, %s16
      %p226 = scmp.lt.s32.totalorder %s16, 4
      %p227 = pnand %p225, %p226
      %p228 = pneg %p227
      // Predicated region
      $region29: #{tpu_custom_call.1} parent=5 // pred_check
        _
      $region30: #{tpu_custom_call.1} parent=5 // pred_check_branch
        %230 = sbr.rel (%p227) target = $region32
      $region31: #{tpu_custom_call.1} parent=5 // pred_region
        %s231 = ssub.s32 %s16, 1
        // Predicated region
        $region33: #{tpu_custom_call.1} parent=31 // pred_check
          %p232 = pneg %p63
        $region34: #{tpu_custom_call.1} parent=31 // pred_check_branch
          %234 = sbr.rel (%p232) target = $region36
        $region35: #{tpu_custom_call.1} parent=31 // pred_region
          %236 = dma.done [#allocation4], 64
        $region36: #{tpu_custom_call.1} parent=31 // pred_fallthru
          _
        %s237 = sand.u32 %s21, 1
        %s238 = scalar_lea.sflag [#allocation7], %s237
        %s239 = sand.u32 %s78, 1
        %s240 = smul.addr %s239, 1024
        %s241 = scalar_lea.vmem [#allocation6], %s240
        // Predicated region
        $region37: #{tpu_custom_call.1} parent=31 // pred_check
          %p242 = pneg %p91
        $region38: #{tpu_custom_call.1} parent=31 // pred_check_branch
          %244 = sbr.rel (%p242) target = $region40
        $region39: #{tpu_custom_call.1} parent=31 // pred_region
          %246 = dma.done %s238, 16384
        $region40: #{tpu_custom_call.1} parent=31 // pred_fallthru
          _
        %s247 = sand.u32 %s21, 1
        %s248 = scalar_lea.sflag [#allocation7], %s247
        %s249 = sand.u32 %s104, 1
        %s250 = smul.addr %s249, 4
        %s251 = scalar_lea.vmem [#allocation8], %s250
        // Predicated region
        $region41: #{tpu_custom_call.1} parent=31 // pred_check
          %p252 = pneg %p117
        $region42: #{tpu_custom_call.1} parent=31 // pred_check_branch
          %254 = sbr.rel (%p252) target = $region44
        $region43: #{tpu_custom_call.1} parent=31 // pred_region
          %256 = dma.done %s248, 64
        $region44: #{tpu_custom_call.1} parent=31 // pred_fallthru
          _
        %p257 = pneg %p63
        %p258 = pneg %p60
        %s259 = sand.u32 %s21, 1
        %s260 = scalar_lea.sflag [#allocation7], %s259
        %s261 = sand.u32 %s78, 1
        %s262 = smul.addr %s261, 1024
        %s263 = scalar_lea.vmem [#allocation6], %s262
        %p264 = pneg %p91
        %p265 = pneg %p88
        %s266 = sand.u32 %s21, 1
        %s267 = scalar_lea.sflag [#allocation7], %s266
        %s268 = sand.u32 %s104, 1
        %s269 = smul.addr %s268, 4
        %s270 = scalar_lea.vmem [#allocation8], %s269
        %p271 = pneg %p117
        %p272 = pneg %p114
        %p273 = pneg %p145
        %p274 = pneg %p142
        %s275 = sand.u32 %s132, 1
        %s276 = scalar_lea.sflag [#allocation5], %s275
        %s277 = sand.u32 %s132, 1
        %s278 = smul.addr %s277, 8
        %s279 = scalar_lea.vmem [#allocation9], %s278
        %s280 = smul.u32 2, %s28
        %s281 = smul.u32 32, %s28
        %s282 = smul.u32 4, %s27
        %s283 = smul.u32 4, %s27
        %s284 = smul.u32 4, %s27
        %p285 = scmp.eq.s32.totalorder %s28, 0
        // Predicated region
        $region45: #{tpu_custom_call.1} parent=31 // pred_check
          %p286 = pneg %p285
        $region46: #{tpu_custom_call.1} parent=31 // pred_check_branch
          %288 = sbr.rel (%p286) target = $region48
        $region47: #{tpu_custom_call.1} parent=31 // pred_region
          %289 = vst [vmem:[#allocation2] sm:$0xff] 0.0
        $region48: #{tpu_custom_call.1} parent=31 // pred_fallthru
          _
        %v290 = vld [vmem:[#allocation2] sm:$0xff]
        %v291 = vld [vmem:[#allocation3] sm:$0xf]
        %293 = vst [vmem:[#allocation1] ss:$4 sm:$0xff] %v291
        %v294 = vld.sshfl [vmem:[#allocation1] sm:$0xff pattern:$0x73625140]
        %v295 = vld.sshfl [vmem:[#allocation1 + $0x8] sm:$0xff pattern:$0x73625140]
        %v298 = vpack.c.bf16 %v294, %v294
        %v299 = vpack.c.bf16 %v295, %v295
        %v300 = vld [vmem:[%s241] sm:$0xff]
        %v301 = vld [vmem:[%s241 + $0x8] sm:$0xff]
        %v302 = vld [vmem:[%s241 + $0x10] sm:$0xff]
        %v303 = vld [vmem:[%s241 + $0x18] sm:$0xff]
        %v304 = vld [vmem:[%s241 + $0x20] sm:$0xff]
        %v305 = vld [vmem:[%s241 + $0x28] sm:$0xff]
        %v306 = vld [vmem:[%s241 + $0x30] sm:$0xff]
        %v307 = vld [vmem:[%s241 + $0x38] sm:$0xff]
        %v308 = vld [vmem:[%s241 + $0x40] sm:$0xff]
        %v309 = vld [vmem:[%s241 + $0x48] sm:$0xff]
        %v310 = vld [vmem:[%s241 + $0x50] sm:$0xff]
        %v311 = vld [vmem:[%s241 + $0x58] sm:$0xff]
        %v312 = vld [vmem:[%s241 + $0x60] sm:$0xff]
        %v313 = vld [vmem:[%s241 + $0x68] sm:$0xff]
        %v314 = vld [vmem:[%s241 + $0x70] sm:$0xff]
        %v315 = vld [vmem:[%s241 + $0x78] sm:$0xff]
        %v316 = vld [vmem:[%s241 + $0x80] sm:$0xff]
        %v317 = vld [vmem:[%s241 + $0x88] sm:$0xff]
        %v318 = vld [vmem:[%s241 + $0x90] sm:$0xff]
        %v319 = vld [vmem:[%s241 + $0x98] sm:$0xff]
        %v320 = vld [vmem:[%s241 + $0xa0] sm:$0xff]
        %v321 = vld [vmem:[%s241 + $0xa8] sm:$0xff]
        %v322 = vld [vmem:[%s241 + $0xb0] sm:$0xff]
        %v323 = vld [vmem:[%s241 + $0xb8] sm:$0xff]
        %v324 = vld [vmem:[%s241 + $0xc0] sm:$0xff]
        %v325 = vld [vmem:[%s241 + $0xc8] sm:$0xff]
        %v326 = vld [vmem:[%s241 + $0xd0] sm:$0xff]
        %v327 = vld [vmem:[%s241 + $0xd8] sm:$0xff]
        %v328 = vld [vmem:[%s241 + $0xe0] sm:$0xff]
        %v329 = vld [vmem:[%s241 + $0xe8] sm:$0xff]
        %v330 = vld [vmem:[%s241 + $0xf0] sm:$0xff]
        %v331 = vld [vmem:[%s241 + $0xf8] sm:$0xff]
        %v332 = vld [vmem:[%s241 + $0x100] sm:$0xff]
        %v333 = vld [vmem:[%s241 + $0x108] sm:$0xff]
        %v334 = vld [vmem:[%s241 + $0x110] sm:$0xff]
        %v335 = vld [vmem:[%s241 + $0x118] sm:$0xff]
        %v336 = vld [vmem:[%s241 + $0x120] sm:$0xff]
        %v337 = vld [vmem:[%s241 + $0x128] sm:$0xff]
        %v338 = vld [vmem:[%s241 + $0x130] sm:$0xff]
        %v339 = vld [vmem:[%s241 + $0x138] sm:$0xff]
        %v340 = vld [vmem:[%s241 + $0x140] sm:$0xff]
        %v341 = vld [vmem:[%s241 + $0x148] sm:$0xff]
        %v342 = vld [vmem:[%s241 + $0x150] sm:$0xff]
        %v343 = vld [vmem:[%s241 + $0x158] sm:$0xff]
        %v344 = vld [vmem:[%s241 + $0x160] sm:$0xff]
        %v345 = vld [vmem:[%s241 + $0x168] sm:$0xff]
        %v346 = vld [vmem:[%s241 + $0x170] sm:$0xff]
        %v347 = vld [vmem:[%s241 + $0x178] sm:$0xff]
        %v348 = vld [vmem:[%s241 + $0x180] sm:$0xff]
        %v349 = vld [vmem:[%s241 + $0x188] sm:$0xff]
        %v350 = vld [vmem:[%s241 + $0x190] sm:$0xff]
        %v351 = vld [vmem:[%s241 + $0x198] sm:$0xff]
        %v352 = vld [vmem:[%s241 + $0x1a0] sm:$0xff]
        %v353 = vld [vmem:[%s241 + $0x1a8] sm:$0xff]
        %v354 = vld [vmem:[%s241 + $0x1b0] sm:$0xff]
        %v355 = vld [vmem:[%s241 + $0x1b8] sm:$0xff]
        %v356 = vld [vmem:[%s241 + $0x1c0] sm:$0xff]
        %v357 = vld [vmem:[%s241 + $0x1c8] sm:$0xff]
        %v358 = vld [vmem:[%s241 + $0x1d0] sm:$0xff]
        %v359 = vld [vmem:[%s241 + $0x1d8] sm:$0xff]
        %v360 = vld [vmem:[%s241 + $0x1e0] sm:$0xff]
        %v361 = vld [vmem:[%s241 + $0x1e8] sm:$0xff]
        %v362 = vld [vmem:[%s241 + $0x1f0] sm:$0xff]
        %v363 = vld [vmem:[%s241 + $0x1f8] sm:$0xff]
        %v364 = vld [vmem:[%s241 + $0x200] sm:$0xff]
        %v365 = vld [vmem:[%s241 + $0x208] sm:$0xff]
        %v366 = vld [vmem:[%s241 + $0x210] sm:$0xff]
        %v367 = vld [vmem:[%s241 + $0x218] sm:$0xff]
        %v368 = vld [vmem:[%s241 + $0x220] sm:$0xff]
        %v369 = vld [vmem:[%s241 + $0x228] sm:$0xff]
        %v370 = vld [vmem:[%s241 + $0x230] sm:$0xff]
        %v371 = vld [vmem:[%s241 + $0x238] sm:$0xff]
        %v372 = vld [vmem:[%s241 + $0x240] sm:$0xff]
        %v373 = vld [vmem:[%s241 + $0x248] sm:$0xff]
        %v374 = vld [vmem:[%s241 + $0x250] sm:$0xff]
        %v375 = vld [vmem:[%s241 + $0x258] sm:$0xff]
        %v376 = vld [vmem:[%s241 + $0x260] sm:$0xff]
        %v377 = vld [vmem:[%s241 + $0x268] sm:$0xff]
        %v378 = vld [vmem:[%s241 + $0x270] sm:$0xff]
        %v379 = vld [vmem:[%s241 + $0x278] sm:$0xff]
        %v380 = vld [vmem:[%s241 + $0x280] sm:$0xff]
        %v381 = vld [vmem:[%s241 + $0x288] sm:$0xff]
        %v382 = vld [vmem:[%s241 + $0x290] sm:$0xff]
        %v383 = vld [vmem:[%s241 + $0x298] sm:$0xff]
        %v384 = vld [vmem:[%s241 + $0x2a0] sm:$0xff]
        %v385 = vld [vmem:[%s241 + $0x2a8] sm:$0xff]
        %v386 = vld [vmem:[%s241 + $0x2b0] sm:$0xff]
        %v387 = vld [vmem:[%s241 + $0x2b8] sm:$0xff]
        %v388 = vld [vmem:[%s241 + $0x2c0] sm:$0xff]
        %v389 = vld [vmem:[%s241 + $0x2c8] sm:$0xff]
        %v390 = vld [vmem:[%s241 + $0x2d0] sm:$0xff]
        %v391 = vld [vmem:[%s241 + $0x2d8] sm:$0xff]
        %v392 = vld [vmem:[%s241 + $0x2e0] sm:$0xff]
        %v393 = vld [vmem:[%s241 + $0x2e8] sm:$0xff]
        %v394 = vld [vmem:[%s241 + $0x2f0] sm:$0xff]
        %v395 = vld [vmem:[%s241 + $0x2f8] sm:$0xff]
        %v396 = vld [vmem:[%s241 + $0x300] sm:$0xff]
        %v397 = vld [vmem:[%s241 + $0x308] sm:$0xff]
        %v398 = vld [vmem:[%s241 + $0x310] sm:$0xff]
        %v399 = vld [vmem:[%s241 + $0x318] sm:$0xff]
        %v400 = vld [vmem:[%s241 + $0x320] sm:$0xff]
        %v401 = vld [vmem:[%s241 + $0x328] sm:$0xff]
        %v402 = vld [vmem:[%s241 + $0x330] sm:$0xff]
        %v403 = vld [vmem:[%s241 + $0x338] sm:$0xff]
        %v404 = vld [vmem:[%s241 + $0x340] sm:$0xff]
        %v405 = vld [vmem:[%s241 + $0x348] sm:$0xff]
        %v406 = vld [vmem:[%s241 + $0x350] sm:$0xff]
        %v407 = vld [vmem:[%s241 + $0x358] sm:$0xff]
        %v408 = vld [vmem:[%s241 + $0x360] sm:$0xff]
        %v409 = vld [vmem:[%s241 + $0x368] sm:$0xff]
        %v410 = vld [vmem:[%s241 + $0x370] sm:$0xff]
        %v411 = vld [vmem:[%s241 + $0x378] sm:$0xff]
        %v412 = vld [vmem:[%s241 + $0x380] sm:$0xff]
        %v413 = vld [vmem:[%s241 + $0x388] sm:$0xff]
        %v414 = vld [vmem:[%s241 + $0x390] sm:$0xff]
        %v415 = vld [vmem:[%s241 + $0x398] sm:$0xff]
        %v416 = vld [vmem:[%s241 + $0x3a0] sm:$0xff]
        %v417 = vld [vmem:[%s241 + $0x3a8] sm:$0xff]
        %v418 = vld [vmem:[%s241 + $0x3b0] sm:$0xff]
        %v419 = vld [vmem:[%s241 + $0x3b8] sm:$0xff]
        %v420 = vld [vmem:[%s241 + $0x3c0] sm:$0xff]
        %v421 = vld [vmem:[%s241 + $0x3c8] sm:$0xff]
        %v422 = vld [vmem:[%s241 + $0x3d0] sm:$0xff]
        %v423 = vld [vmem:[%s241 + $0x3d8] sm:$0xff]
        %v424 = vld [vmem:[%s241 + $0x3e0] sm:$0xff]
        %v425 = vld [vmem:[%s241 + $0x3e8] sm:$0xff]
        %v426 = vld [vmem:[%s241 + $0x3f0] sm:$0xff]
        %v427 = vld [vmem:[%s241 + $0x3f8] sm:$0xff]
        %v428 = vpack.c.bf16 %v304, %v300
        %v429 = vpack.c.bf16 %v305, %v301
        %v430 = vpack.c.bf16 %v306, %v302
        %v431 = vpack.c.bf16 %v307, %v303
        %v432 = vpack.c.bf16 %v312, %v308
        %v433 = vpack.c.bf16 %v313, %v309
        %v434 = vpack.c.bf16 %v314, %v310
        %v435 = vpack.c.bf16 %v315, %v311
        %v436 = vpack.c.bf16 %v320, %v316
        %v437 = vpack.c.bf16 %v321, %v317
        %v438 = vpack.c.bf16 %v322, %v318
        %v439 = vpack.c.bf16 %v323, %v319
        %v440 = vpack.c.bf16 %v328, %v324
        %v441 = vpack.c.bf16 %v329, %v325
        %v442 = vpack.c.bf16 %v330, %v326
        %v443 = vpack.c.bf16 %v331, %v327
        %v444 = vpack.c.bf16 %v336, %v332
        %v445 = vpack.c.bf16 %v337, %v333
        %v446 = vpack.c.bf16 %v338, %v334
        %v447 = vpack.c.bf16 %v339, %v335
        %v448 = vpack.c.bf16 %v344, %v340
        %v449 = vpack.c.bf16 %v345, %v341
        %v450 = vpack.c.bf16 %v346, %v342
        %v451 = vpack.c.bf16 %v347, %v343
        %v452 = vpack.c.bf16 %v352, %v348
        %v453 = vpack.c.bf16 %v353, %v349
        %v454 = vpack.c.bf16 %v354, %v350
        %v455 = vpack.c.bf16 %v355, %v351
        %v456 = vpack.c.bf16 %v360, %v356
        %v457 = vpack.c.bf16 %v361, %v357
        %v458 = vpack.c.bf16 %v362, %v358
        %v459 = vpack.c.bf16 %v363, %v359
        %v460 = vpack.c.bf16 %v368, %v364
        %v461 = vpack.c.bf16 %v369, %v365
        %v462 = vpack.c.bf16 %v370, %v366
        %v463 = vpack.c.bf16 %v371, %v367
        %v464 = vpack.c.bf16 %v376, %v372
        %v465 = vpack.c.bf16 %v377, %v373
        %v466 = vpack.c.bf16 %v378, %v374
        %v467 = vpack.c.bf16 %v379, %v375
        %v468 = vpack.c.bf16 %v384, %v380
        %v469 = vpack.c.bf16 %v385, %v381
        %v470 = vpack.c.bf16 %v386, %v382
        %v471 = vpack.c.bf16 %v387, %v383
        %v472 = vpack.c.bf16 %v392, %v388
        %v473 = vpack.c.bf16 %v393, %v389
        %v474 = vpack.c.bf16 %v394, %v390
        %v475 = vpack.c.bf16 %v395, %v391
        %v476 = vpack.c.bf16 %v400, %v396
        %v477 = vpack.c.bf16 %v401, %v397
        %v478 = vpack.c.bf16 %v402, %v398
        %v479 = vpack.c.bf16 %v403, %v399
        %v480 = vpack.c.bf16 %v408, %v404
        %v481 = vpack.c.bf16 %v409, %v405
        %v482 = vpack.c.bf16 %v410, %v406
        %v483 = vpack.c.bf16 %v411, %v407
        %v484 = vpack.c.bf16 %v416, %v412
        %v485 = vpack.c.bf16 %v417, %v413
        %v486 = vpack.c.bf16 %v418, %v414
        %v487 = vpack.c.bf16 %v419, %v415
        %v488 = vpack.c.bf16 %v424, %v420
        %v489 = vpack.c.bf16 %v425, %v421
        %v490 = vpack.c.bf16 %v426, %v422
        %v491 = vpack.c.bf16 %v427, %v423
        %492 = vmatpush.bf16.msra.mxu0 %v456
        %493 = vmatpush.bf16.msra.mxu0 %v452
        %494 = vmatpush.bf16.msra.mxu0 %v448
        %495 = vmatpush.bf16.msra.mxu0 %v444
        %496 = vmatpush.bf16.msra.mxu0 %v440
        %497 = vmatpush.bf16.msra.mxu0 %v436
        %498 = vmatpush.bf16.msra.mxu0 %v432
        %499 = vmatpush.bf16.msra.mxu0 %v428
        %500 = vmatmul.bf16.gmra.mxu0 %v298
        %v501 = vpop.f32.mrf.mxu0
        %v502 = vadd.f32 0.0, %v501
        %v503 = vpop.f32.mrf.mxu0
        %504 = vdwg.mxu0
        %505 = vmatpush.bf16.msra.mxu0 %v488
        %506 = vmatpush.bf16.msra.mxu0 %v484
        %507 = vmatpush.bf16.msra.mxu0 %v480
        %508 = vmatpush.bf16.msra.mxu0 %v476
        %509 = vmatpush.bf16.msra.mxu0 %v472
        %510 = vmatpush.bf16.msra.mxu0 %v468
        %511 = vmatpush.bf16.msra.mxu0 %v464
        %512 = vmatpush.bf16.msra.mxu0 %v460
        %513 = vmatmul.bf16.gmra.mxu0 %v299
        %v514 = vpop.f32.mrf.mxu0
        %v515 = vadd.f32 %v502, %v514
        %v516 = vpop.f32.mrf.mxu0
        %517 = vdwg.mxu0
        %518 = vmatpush.bf16.msra.mxu0 %v457
        %519 = vmatpush.bf16.msra.mxu0 %v453
        %520 = vmatpush.bf16.msra.mxu0 %v449
        %521 = vmatpush.bf16.msra.mxu0 %v445
        %522 = vmatpush.bf16.msra.mxu0 %v441
        %523 = vmatpush.bf16.msra.mxu0 %v437
        %524 = vmatpush.bf16.msra.mxu0 %v433
        %525 = vmatpush.bf16.msra.mxu0 %v429
        %526 = vmatmul.bf16.gmra.mxu0 %v298
        %v527 = vpop.f32.mrf.mxu0
        %v528 = vadd.f32 0.0, %v527
        %v529 = vpop.f32.mrf.mxu0
        %530 = vdwg.mxu0
        %531 = vmatpush.bf16.msra.mxu0 %v489
        %532 = vmatpush.bf16.msra.mxu0 %v485
        %533 = vmatpush.bf16.msra.mxu0 %v481
        %534 = vmatpush.bf16.msra.mxu0 %v477
        %535 = vmatpush.bf16.msra.mxu0 %v473
        %536 = vmatpush.bf16.msra.mxu0 %v469
        %537 = vmatpush.bf16.msra.mxu0 %v465
        %538 = vmatpush.bf16.msra.mxu0 %v461
        %539 = vmatmul.bf16.gmra.mxu0 %v299
        %v540 = vpop.f32.mrf.mxu0
        %v541 = vadd.f32 %v528, %v540
        %v542 = vpop.f32.mrf.mxu0
        %543 = vdwg.mxu0
        %544 = vmatpush.bf16.msra.mxu0 %v458
        %545 = vmatpush.bf16.msra.mxu0 %v454
        %546 = vmatpush.bf16.msra.mxu0 %v450
        %547 = vmatpush.bf16.msra.mxu0 %v446
        %548 = vmatpush.bf16.msra.mxu0 %v442
        %549 = vmatpush.bf16.msra.mxu0 %v438
        %550 = vmatpush.bf16.msra.mxu0 %v434
        %551 = vmatpush.bf16.msra.mxu0 %v430
        %552 = vmatmul.bf16.gmra.mxu0 %v298
        %v553 = vpop.f32.mrf.mxu0
        %v554 = vadd.f32 0.0, %v553
        %v555 = vpop.f32.mrf.mxu0
        %556 = vdwg.mxu0
        %557 = vmatpush.bf16.msra.mxu0 %v490
        %558 = vmatpush.bf16.msra.mxu0 %v486
        %559 = vmatpush.bf16.msra.mxu0 %v482
        %560 = vmatpush.bf16.msra.mxu0 %v478
        %561 = vmatpush.bf16.msra.mxu0 %v474
        %562 = vmatpush.bf16.msra.mxu0 %v470
        %563 = vmatpush.bf16.msra.mxu0 %v466
        %564 = vmatpush.bf16.msra.mxu0 %v462
        %565 = vmatmul.bf16.gmra.mxu0 %v299
        %v566 = vpop.f32.mrf.mxu0
        %v567 = vadd.f32 %v554, %v566
        %v568 = vpop.f32.mrf.mxu0
        %569 = vdwg.mxu0
        %570 = vmatpush.bf16.msra.mxu0 %v459
        %571 = vmatpush.bf16.msra.mxu0 %v455
        %572 = vmatpush.bf16.msra.mxu0 %v451
        %573 = vmatpush.bf16.msra.mxu0 %v447
        %574 = vmatpush.bf16.msra.mxu0 %v443
        %575 = vmatpush.bf16.msra.mxu0 %v439
        %576 = vmatpush.bf16.msra.mxu0 %v435
        %577 = vmatpush.bf16.msra.mxu0 %v431
        %578 = vmatmul.bf16.gmra.mxu0 %v298
        %v579 = vpop.f32.mrf.mxu0
        %v580 = vadd.f32 0.0, %v579
        %v581 = vpop.f32.mrf.mxu0
        %582 = vdwg.mxu0
        %583 = vmatpush.bf16.msra.mxu0 %v491
        %584 = vmatpush.bf16.msra.mxu0 %v487
        %585 = vmatpush.bf16.msra.mxu0 %v483
        %586 = vmatpush.bf16.msra.mxu0 %v479
        %587 = vmatpush.bf16.msra.mxu0 %v475
        %588 = vmatpush.bf16.msra.mxu0 %v471
        %589 = vmatpush.bf16.msra.mxu0 %v467
        %590 = vmatpush.bf16.msra.mxu0 %v463
        %591 = vmatmul.bf16.gmra.mxu0 %v299
        %v592 = vpop.f32.mrf.mxu0
        %v593 = vadd.f32 %v580, %v592
        %v594 = vpop.f32.mrf.mxu0
        %595 = vdwg.mxu0
        %v600 = vrot.slane %v541, 6
        %v601 = vrot.slane %v567, 4
        %v602 = vrot.slane %v593, 2
        %vm603 = vcmask 1041408
        %v604 = vsel %vm603, %v515, %v600
        %vm605 = vcmask 1045508
        %v606 = vsel %vm605, %v601, %v602
        %vm607 = vcmask 1043456
        %v608 = vsel %vm607, %v604, %v606
        %v610 = vadd.f32 %v290, %v608
        %611 = vst [vmem:[#allocation2] sm:$0xff] %v610
        // Predicated region
        $region49: #{tpu_custom_call.1} parent=31 // pred_check
          %p612 = pneg %p285
        $region50: #{tpu_custom_call.1} parent=31 // pred_check_branch
          %614 = sbr.rel (%p612) target = $region52
        $region51: #{tpu_custom_call.1} parent=31 // pred_region
          %v615 = vld [vmem:[#allocation2] sm:$0xff]
          %v616 = vld [vmem:[%s251] sm:$0xf]
          %v618 = vperm.slane %v616, 0
          %v619 = vperm.slane %v616, 1
          %v620 = vperm.slane %v616, 2
          %v621 = vperm.slane %v616, 3
          %v622 = vrot.slane %v619, 6
          %v623 = vrot.slane %v620, 4
          %v624 = vrot.slane %v621, 2
          %v625 = vsel %vm603, %v618, %v622
          %v626 = vsel %vm605, %v623, %v624
          %v627 = vsel %vm607, %v625, %v626
          %v629 = vadd.f32 %v615, %v627
          %630 = vst [vmem:[%s279] sm:$0xff] %v629
        $region52: #{tpu_custom_call.1} parent=31 // pred_fallthru
          _
        %s631 = sand.u32 %s132, 1
        %s632 = scalar_lea.sflag [#allocation5], %s631
        %s633 = sand.u32 %s132, 1
        %s634 = smul.addr %s633, 8
        %s635 = scalar_lea.vmem [#allocation9], %s634
        // Predicated region
        $region53: #{tpu_custom_call.1} parent=31 // pred_check
          %p636 = pneg %p142
        $region54: #{tpu_custom_call.1} parent=31 // pred_check_branch
          %638 = sbr.rel (%p636) target = $region56
        $region55: #{tpu_custom_call.1} parent=31 // pred_region
          %s639 = smul.u32 4, %s27
          %641 = vsyncadd %s632, 0
          %s642 = smul.addr %s26, 12
          %s643 = sadd.s32 %s639, %s642
          %s644 = smul.addr %s643, 2
          %s645 = scalar_lea.hbm %s3, %s644
          %s647 = sshll.u32 %s635, 4
          %s648 = int_to_ptr.vmem [resolvable:$true] %s647
          %s649 = sshll.u32 %s645, 4
          %s650 = int_to_ptr.hbm [resolvable:$true] %s649
          %652 = dma.vmem_to_hbm [thread:$0]  %s648, 128, %s650, %s632
        $region56: #{tpu_custom_call.1} parent=31 // pred_fallthru
          _
      $region32: #{tpu_custom_call.1} parent=5 // pred_fallthru
        _
      %p653 = scmp.le.s32.totalorder 2, %s16
      // Predicated region
      $region57: #{tpu_custom_call.1} parent=5 // pred_check
        %p654 = pneg %p653
      $region58: #{tpu_custom_call.1} parent=5 // pred_check_branch
        %656 = sbr.rel (%p654) target = $region60
      $region59: #{tpu_custom_call.1} parent=5 // pred_region
        %s657 = ssub.s32 %s16, 2
        // Predicated region
        $region61: #{tpu_custom_call.1} parent=59 // pred_check
          %p658 = pneg %p148
        $region62: #{tpu_custom_call.1} parent=59 // pred_check_branch
          %660 = sbr.rel (%p658) target = $region64
        $region63: #{tpu_custom_call.1} parent=59 // pred_region
          %s661 = sand.u32 %s133, 1
          %s662 = scalar_lea.sflag [#allocation5], %s661
          %s663 = sand.u32 %s133, 1
          %s664 = smul.addr %s663, 8
          %s665 = scalar_lea.vmem [#allocation9], %s664
          %667 = dma.done %s662, 128
        $region64: #{tpu_custom_call.1} parent=59 // pred_fallthru
          _
      $region60: #{tpu_custom_call.1} parent=5 // pred_fallthru
        _
    $region6: #{tpu_custom_call.1} parent=1 // loop_footer
      %s20 = sadd.s32 1, %s16
    $region7: #{tpu_custom_call.1} parent=1 // loop_footer_branch
      %15 = sbr.rel target = $region3
    $region8: #{tpu_custom_call.1} parent=1 // loop_exit
      _
    %668 = vsyncpa [#allocation4], 1
    %s669 = scalar_lea.sflag [#allocation4], 1
    %670 = vsyncpa %s669, 1
    %671 = vsyncpa [#allocation7], 1
    %s672 = scalar_lea.sflag [#allocation7], 1
    %673 = vsyncpa %s672, 1
    %674 = vsyncpa [#allocation5], 1
    %s675 = scalar_lea.sflag [#allocation5], 1
    %676 = vsyncpa %s675, 1

</llo_original>
